<compile_context>
chip_gen: v7x
topology: tpu7x:2x2x1
jax: 0.10.0
libtpu: 0.0.40
codegen_flags: <defaults>
</compile_context>

<pallas_src>
import jax
import jax.numpy as jnp
import numpy as np
from jax.experimental import pallas as pl
from jax.experimental.pallas import tpu as pltpu


def _round_up(x, m):
    return (x + m - 1) // m * m


def blr_kernel(x_ref, w_ref, ews_ref, s_ref, mid_ref, last_ref):
    # x_ref:    (tm, Dp)  VMEM tile of zero-padded X
    # w_ref:    (1, Dp)   VMEM, w as a lane-dense row (zero padded)
    # ews_ref:  (1, Dp)   VMEM, exp(w_sigma) as a lane-dense row (zero padded)
    # s_ref:    (2,)      SMEM scalars: [b, exp(b_sigma) + b**2]
    # mid_ref/last_ref: (1, tm) lane-dense output blocks
    x = x_ref[...]
    w_row = w_ref[...]
    ews_row = ews_ref[...]
    b = s_ref[0]
    c1 = s_ref[1]          # exp(b_sigma) + b**2 (precomputed in wrapper)

    # Row-wise lane reductions on VPU/XLU; the kernel is HBM-bound, so this
    # avoids wasting MXU columns on 1-wide matvecs.
    a = jnp.sum(x * w_row, axis=1)               # (tm,)
    xsq = jnp.sum((x * x) * ews_row, axis=1)     # (tm,)

    mid = a + b
    last = a * a + 2.0 * b * a + xsq + c1

    mid_ref[...] = mid.reshape(1, -1)
    last_ref[...] = last.reshape(1, -1)


def bayesian_linear_regression_forward(x, w, b, w_sigma, b_sigma, tm=1024):
    N, D = x.shape
    Dp = _round_up(D, 128)

    # Row tile: biggest allowed by an ~8 MiB-per-buffer budget (double
    # buffered -> 16 MiB for X), capped by the requested tm and padded N.
    max_rows = max(128, ((8 * 1024 * 1024) // (Dp * 4)) // 128 * 128)
    tm = max(128, min(tm, max_rows, _round_up(N, 128)))
    Np = _round_up(N, tm)

    f32 = jnp.float32
    # Zero-pad rows/cols; padded columns of exp(w_sigma)/w are zero so they
    # contribute nothing to the reductions. Padded rows are sliced off below.
    x_p = jnp.zeros((Np, Dp), f32).at[:N, :D].set(x.astype(f32))
    w_row = jnp.zeros((1, Dp), f32).at[:, :D].set(w.astype(f32).reshape(1, D))
    ews_row = jnp.zeros((1, Dp), f32).at[:, :D].set(
        jnp.exp(w_sigma.astype(f32)).reshape(1, D))

    b_val = b.astype(f32).reshape(())
    bs_val = b_sigma.astype(f32).reshape(())
    scalars = jnp.stack([b_val, jnp.exp(bs_val) + b_val * b_val])

    # Double-buffered X tile + outputs + params, with headroom; at least
    # 32 MiB so v5e's 16 MiB default scoped limit is not the constraint.
    vmem_need = 2 * tm * Dp * 4 + 2 * 2 * tm * 4 + 2 * 2 * Dp * 4
    vmem_limit = max(32 * 1024 * 1024, vmem_need * 3 // 2 + (2 << 20))

    mid_row, last_row = pl.pallas_call(
        blr_kernel,
        out_shape=(
            jax.ShapeDtypeStruct((1, Np), f32),
            jax.ShapeDtypeStruct((1, Np), f32),
        ),
        grid_spec=pltpu.PrefetchScalarGridSpec(
            num_scalar_prefetch=0,
            grid=(Np // tm,),
            in_specs=[
                pl.BlockSpec((tm, Dp), lambda i: (i, 0)),   # X tile
                pl.BlockSpec((1, Dp), lambda i: (0, 0)),    # w row
                pl.BlockSpec((1, Dp), lambda i: (0, 0)),    # exp(w_sigma) row
                pl.BlockSpec(memory_space=pltpu.SMEM),      # scalars
            ],
            out_specs=(
                pl.BlockSpec((1, tm), lambda i: (0, i)),    # middle (lane-dense)
                pl.BlockSpec((1, tm), lambda i: (0, i)),    # last   (lane-dense)
            ),
        ),
        compiler_params=pltpu.CompilerParams(
            dimension_semantics=("parallel",),
            vmem_limit_bytes=int(vmem_limit)),
    )(x_p, w_row, ews_row, scalars)

    middle_term = mid_row[0, :N].reshape(N, 1)
    last_term = last_row[0, :N].reshape(N, 1)

    # KL depends only on the (D,1)/(1,1) parameters -> plain JAX, once.
    def _kl(mean, sig):
        return jnp.mean(0.5 * (jnp.exp(sig) + mean ** 2 - sig - 1.0))

    kl_tot = _kl(w.astype(f32), w_sigma.astype(f32)) + _kl(b_val, bs_val)
    return middle_term, last_term, kl_tot


def reference_forward(x, w, b, w_sigma, b_sigma):
    a = x @ w
    middle_term = a + b
    last_term = (a ** 2 + 2.0 * b * a + (x ** 2) @ jnp.exp(w_sigma)
                 + jnp.exp(b_sigma) + b ** 2)

    def kl(mean, sig):
        return jnp.mean(0.5 * (jnp.exp(sig) + mean ** 2 - sig - 1.0))

    kl_tot = kl(w, w_sigma) + kl(b, b_sigma)
    return middle_term, last_term, kl_tot


if __name__ == "__main__":
    nr_col = 32
    N = 16

    key = jax.random.PRNGKey(0)
    kx, kw, kb, kws, kbs = jax.random.split(key, 5)

    x = jax.random.normal(kx, (N, nr_col), dtype=jnp.float32)
    w = jax.random.normal(kw, (nr_col, 1), dtype=jnp.float32)
    b = jax.random.normal(kb, (1, 1), dtype=jnp.float32)
    w_sigma = jax.random.normal(kws, (nr_col, 1), dtype=jnp.float32)
    b_sigma = jax.random.normal(kbs, (1, 1), dtype=jnp.float32)

    mid, last, kl_tot = bayesian_linear_regression_forward(
        x, w, b, w_sigma, b_sigma)
    jax.block_until_ready((mid, last, kl_tot))

    mid_ref, last_ref, kl_ref = reference_forward(x, w, b, w_sigma, b_sigma)
    np.testing.assert_allclose(np.asarray(mid), np.asarray(mid_ref),
                               rtol=1e-5, atol=1e-5)
    np.testing.assert_allclose(np.asarray(last), np.asarray(last_ref),
                               rtol=1e-5, atol=1e-5)
    np.testing.assert_allclose(np.asarray(kl_tot), np.asarray(kl_ref),
                               rtol=1e-5, atol=1e-5)

    print("KERNEL_OK")
</pallas_src>

<mosaic_0001>
module attributes {stable_mosaic.version = 11 : i64} {
  func.func @blr_kernel(%arg0: i32, %arg1: memref<128x128xf32, #tpu.memory_space<vmem>>, %arg2: memref<1x128xf32, #tpu.memory_space<vmem>>, %arg3: memref<1x128xf32, #tpu.memory_space<vmem>>, %arg4: memref<2xf32, #tpu.memory_space<smem>>, %arg5: memref<1x128xf32, #tpu.memory_space<vmem>>, %arg6: memref<1x128xf32, #tpu.memory_space<vmem>>) attributes {dimension_semantics = [#tpu.dimension_semantics<parallel>], iteration_bounds = array<i64: 1>, scalar_prefetch = 0 : i64, scratch_operands = 0 : i64, tpu.core_type = #tpu.core_type<tc>, window_params = [{transform_indices = @transform_0, window_bounds = array<i64: 128, 128>}, {pipeline_mode = #tpu.pipeline_mode<synchronous>, transform_indices = @transform_1, window_bounds = array<i64: 1, 128>}, {pipeline_mode = #tpu.pipeline_mode<synchronous>, transform_indices = @transform_2, window_bounds = array<i64: 1, 128>}, {transform_indices = @transform_3, window_bounds = array<i64: 2>}, {transform_indices = @transform_4, window_bounds = array<i64: 1, 128>}, {transform_indices = @transform_5, window_bounds = array<i64: 1, 128>}]} {
    %c0 = arith.constant 0 : index
    %c0_0 = arith.constant 0 : index
    %0 = vector.load %arg1[%c0, %c0_0] : memref<128x128xf32, #tpu.memory_space<vmem>>, vector<128x128xf32>
    %c0_1 = arith.constant 0 : index
    %c0_2 = arith.constant 0 : index
    %1 = vector.load %arg2[%c0_1, %c0_2] : memref<1x128xf32, #tpu.memory_space<vmem>>, vector<1x128xf32>
    %c0_3 = arith.constant 0 : index
    %c0_4 = arith.constant 0 : index
    %2 = vector.load %arg3[%c0_3, %c0_4] : memref<1x128xf32, #tpu.memory_space<vmem>>, vector<1x128xf32>
    %c0_5 = arith.constant 0 : index
    %3 = memref.load %arg4[%c0_5] : memref<2xf32, #tpu.memory_space<smem>>
    %c1 = arith.constant 1 : index
    %4 = memref.load %arg4[%c1] : memref<2xf32, #tpu.memory_space<smem>>
    %5 = vector.broadcast %1 : vector<1x128xf32> to vector<128x128xf32>
    %6 = arith.mulf %0, %5 : vector<128x128xf32>
    %cst = arith.constant dense<0.000000e+00> : vector<128xf32>
    %7 = vector.multi_reduction <add>, %6, %cst [1] : vector<128x128xf32> to vector<128xf32>
    %8 = arith.mulf %0, %0 : vector<128x128xf32>
    %9 = vector.broadcast %2 : vector<1x128xf32> to vector<128x128xf32>
    %10 = arith.mulf %8, %9 : vector<128x128xf32>
    %cst_6 = arith.constant dense<0.000000e+00> : vector<128xf32>
    %11 = vector.multi_reduction <add>, %10, %cst_6 [1] : vector<128x128xf32> to vector<128xf32>
    %12 = vector.broadcast %3 : f32 to vector<128xf32>
    %13 = arith.addf %7, %12 : vector<128xf32>
    %14 = arith.mulf %7, %7 : vector<128xf32>
    %cst_7 = arith.constant 2.000000e+00 : f32
    %15 = arith.mulf %cst_7, %3 : f32
    %16 = vector.broadcast %15 : f32 to vector<128xf32>
    %17 = arith.mulf %16, %7 : vector<128xf32>
    %18 = arith.addf %14, %17 : vector<128xf32>
    %19 = arith.addf %18, %11 : vector<128xf32>
    %20 = vector.broadcast %4 : f32 to vector<128xf32>
    %21 = arith.addf %19, %20 : vector<128xf32>
    %22 = vector.shape_cast %13 : vector<128xf32> to vector<1x128xf32>
    %c0_8 = arith.constant 0 : index
    %c0_9 = arith.constant 0 : index
    %23 = vector.load %arg5[%c0_8, %c0_9] : memref<1x128xf32, #tpu.memory_space<vmem>>, vector<1x128xf32>
    tpu.vector_store %arg5[%c0_8, %c0_9], %22 {strides = array<i32>} : memref<1x128xf32, #tpu.memory_space<vmem>>, vector<1x128xf32>,
    %24 = vector.shape_cast %21 : vector<128xf32> to vector<1x128xf32>
    %c0_10 = arith.constant 0 : index
    %c0_11 = arith.constant 0 : index
    %25 = vector.load %arg6[%c0_10, %c0_11] : memref<1x128xf32, #tpu.memory_space<vmem>>, vector<1x128xf32>
    tpu.vector_store %arg6[%c0_10, %c0_11], %24 {strides = array<i32>} : memref<1x128xf32, #tpu.memory_space<vmem>>, vector<1x128xf32>,
    return
  }
  func.func @transform_0(%arg0: i32) -> (i32, i32) {
    %c0_i32 = arith.constant 0 : i32
    %c0_i32_0 = arith.constant 0 : i32
    return %arg0, %c0_i32 : i32, i32
  }
  func.func @transform_1(%arg0: i32) -> (i32, i32) {
    %c0_i32 = arith.constant 0 : i32
    %c0_i32_0 = arith.constant 0 : i32
    %c0_i32_1 = arith.constant 0 : i32
    return %c0_i32, %c0_i32_0 : i32, i32
  }
  func.func @transform_2(%arg0: i32) -> (i32, i32) {
    %c0_i32 = arith.constant 0 : i32
    %c0_i32_0 = arith.constant 0 : i32
    %c0_i32_1 = arith.constant 0 : i32
    return %c0_i32, %c0_i32_0 : i32, i32
  }
  func.func @transform_3(%arg0: i32) -> i32 {
    %c0_i32 = arith.constant 0 : i32
    %c0_i32_0 = arith.constant 0 : i32
    return %c0_i32 : i32
  }
  func.func @transform_4(%arg0: i32) -> (i32, i32) {
    %c0_i32 = arith.constant 0 : i32
    %c0_i32_0 = arith.constant 0 : i32
    return %c0_i32, %arg0 : i32, i32
  }
  func.func @transform_5(%arg0: i32) -> (i32, i32) {
    %c0_i32 = arith.constant 0 : i32
    %c0_i32_0 = arith.constant 0 : i32
    return %c0_i32, %arg0 : i32, i32
  }
}

</mosaic_0001>

<llo_original>
// kernel: tpu_custom_call.1
$region0: #{tpu_custom_call.1}
  #allocation0 [shape = 'u32[]', space=smem, size = 0x4, offset = 0x4, fixed_abs, tag = 'smem constant byte address 0x4 - core index']
  #allocation1 [shape = 'u32[144,128]{1,0:T(1,128)}', space=vmem, size = 0x12000, scoped, tag = 'internal scratch']
  %s0 = inlined_call_operand.hbm [shape: f32[128,128], index: 0, kind: input, shape index: {}]
  %s1 = inlined_call_operand.vmem [shape: f32[1,128], index: 1, kind: input, shape index: {}]
  %s2 = inlined_call_operand.vmem [shape: f32[1,128], index: 2, kind: input, shape index: {}]
  %s3 = inlined_call_operand.vmem [shape: f32[2], index: 3, kind: input, shape index: {}]
  %s4 = inlined_call_operand.hbm [shape: f32[1,128], index: 4, kind: output, shape index: {0}]
  %s5 = inlined_call_operand.hbm [shape: f32[1,128], index: 5, kind: output, shape index: {1}]
  %6 = xla_tuple %s4, %s5
  %s7 = sld [smem:[#allocation0]]
  $region42: #{tpu_custom_call.1} parent=0
    _
  %s9 = ssub.s32 1, %s7
  %s10 = scalar_select 0, %s9, %s7
  $region1: #{tpu_custom_call.1} parent=0
    #allocation2 [shape = 'u8[65536]{0}', space=vmem, size = 0x10000, scoped, tag = 'input window, operand 0, single buffered']
    #allocation3 [shape = 's32[1]{0}', space=sflag, size = 0x4, scoped, tag = 'scoped memory for tpu_custom_call.1']
    #allocation4 [shape = 's32[1]{0}', space=sflag, size = 0x4, scoped, tag = 'scoped memory for tpu_custom_call.1']
    #allocation5 [shape = 's32[1]{0}', space=sflag, size = 0x4, scoped, tag = 'scoped memory for tpu_custom_call.1']
    #allocation6 [shape = 'u8[512]{0}', space=smem, size = 0x200, scoped, tag = 'input window, operand 3, single buffered']
    #allocation7 [shape = 'u8[512]{0}', space=vmem, size = 0x400, scoped, tag = 'output window, operand 0, single buffered']
    #allocation8 [shape = 'u8[512]{0}', space=vmem, size = 0x400, scoped, tag = 'output window, operand 1, single buffered']
    #allocation9 [shape = 's32[1]{0}', space=sflag, size = 0x4, scoped, tag = 'scoped memory for tpu_custom_call.1']
    %11 = vsyncpa [#allocation3], 0
    %12 = vsyncpa [#allocation5], 0
    %13 = vsyncpa [#allocation4], 0
    %14 = vsyncpa [#allocation9], 0
    // Predicated region
    $region2: #{tpu_custom_call.1} parent=1 // pred_check
      _
    $region3: #{tpu_custom_call.1} parent=1 // pred_check_branch
      %16 = sbr.rel (0) target = $region5
    $region4: #{tpu_custom_call.1} parent=1 // pred_region
      %s18 = ssub.s32 2048, 2048
      %19 = vsyncadd [#allocation3], %s18
      %s20 = sshll.u32 [#allocation2], 4
      %s21 = int_to_ptr.vmem [resolvable:$true] %s20
      %26 = dma.hbm_to_vmem [thread:$0]  %s0, 2048, %s21, [#allocation3], 128, 128, 8
    $region5: #{tpu_custom_call.1} parent=1 // pred_fallthru
      _
    // Predicated region
    $region6: #{tpu_custom_call.1} parent=1 // pred_check
      _
    $region7: #{tpu_custom_call.1} parent=1 // pred_check_branch
      %28 = sbr.rel (0) target = $region9
    $region8: #{tpu_custom_call.1} parent=1 // pred_region
      _
    $region9: #{tpu_custom_call.1} parent=1 // pred_fallthru
      _
    // Predicated region
    $region10: #{tpu_custom_call.1} parent=1 // pred_check
      _
    $region11: #{tpu_custom_call.1} parent=1 // pred_check_branch
      %30 = sbr.rel (0) target = $region13
    $region12: #{tpu_custom_call.1} parent=1 // pred_region
      _
    $region13: #{tpu_custom_call.1} parent=1 // pred_fallthru
      _
    // Predicated region
    $region14: #{tpu_custom_call.1} parent=1 // pred_check
      _
    $region15: #{tpu_custom_call.1} parent=1 // pred_check_branch
      %32 = sbr.rel (0) target = $region17
    $region16: #{tpu_custom_call.1} parent=1 // pred_region
      %s34 = ssub.s32 16, 16
      %35 = vsyncadd [#allocation5], %s34
      %s37 = sshll.u32 %s3, 4
      %s38 = int_to_ptr.vmem [resolvable:$true] %s37
      %40 = dma.vmem_to_smem %s38, 16, [#allocation6], [#allocation5]
    $region17: #{tpu_custom_call.1} parent=1 // pred_fallthru
      _
    // Predicated region
    $region18: #{tpu_custom_call.1} parent=1 // pred_check
      _
    $region19: #{tpu_custom_call.1} parent=1 // pred_check_branch
      %42 = sbr.rel (0) target = $region21
    $region20: #{tpu_custom_call.1} parent=1 // pred_region
      %43 = dma.done [#allocation3], 2048
    $region21: #{tpu_custom_call.1} parent=1 // pred_fallthru
      _
    // Predicated region
    $region22: #{tpu_custom_call.1} parent=1 // pred_check
      _
    $region23: #{tpu_custom_call.1} parent=1 // pred_check_branch
      %45 = sbr.rel (0) target = $region25
    $region24: #{tpu_custom_call.1} parent=1 // pred_region
      %46 = dma.done [#allocation5], 16
    $region25: #{tpu_custom_call.1} parent=1 // pred_fallthru
      _
    %47 = sfence
    %v48 = vld [vmem:[#allocation2] sm:$0xff]
    %v49 = vld [vmem:[#allocation2 + $0x8] sm:$0xff]
    %v50 = vld [vmem:[#allocation2 + $0x10] sm:$0xff]
    %v51 = vld [vmem:[#allocation2 + $0x18] sm:$0xff]
    %v52 = vld [vmem:[#allocation2 + $0x20] sm:$0xff]
    %v53 = vld [vmem:[#allocation2 + $0x28] sm:$0xff]
    %v54 = vld [vmem:[#allocation2 + $0x30] sm:$0xff]
    %v55 = vld [vmem:[#allocation2 + $0x38] sm:$0xff]
    %v56 = vld [vmem:[#allocation2 + $0x40] sm:$0xff]
    %v57 = vld [vmem:[#allocation2 + $0x48] sm:$0xff]
    %v58 = vld [vmem:[#allocation2 + $0x50] sm:$0xff]
    %v59 = vld [vmem:[#allocation2 + $0x58] sm:$0xff]
    %v60 = vld [vmem:[#allocation2 + $0x60] sm:$0xff]
    %v61 = vld [vmem:[#allocation2 + $0x68] sm:$0xff]
    %v62 = vld [vmem:[#allocation2 + $0x70] sm:$0xff]
    %v63 = vld [vmem:[#allocation2 + $0x78] sm:$0xff]
    %v64 = vld [vmem:[%s1] sm:$0x1]
    %v65 = vld [vmem:[%s2] sm:$0x1]
    %s66 = sld [smem:[#allocation6]]
    %s67 = sld [smem:[#allocation6 + $0x1]]
    %v69 = vlaneseq
    %v70 = vshrl.u32 %v69, 7
    %v71 = vsub.s32 0, %v70
    %v72 = vrot.slane %v64, %v71
    %v74 = vmul.f32 %v48, %v72
    %v75 = vmul.f32 %v49, %v72
    %v76 = vmul.f32 %v50, %v72
    %v77 = vmul.f32 %v51, %v72
    %v78 = vmul.f32 %v52, %v72
    %v79 = vmul.f32 %v53, %v72
    %v80 = vmul.f32 %v54, %v72
    %v81 = vmul.f32 %v55, %v72
    %v82 = vmul.f32 %v56, %v72
    %v83 = vmul.f32 %v57, %v72
    %v84 = vmul.f32 %v58, %v72
    %v85 = vmul.f32 %v59, %v72
    %v86 = vmul.f32 %v60, %v72
    %v87 = vmul.f32 %v61, %v72
    %v88 = vmul.f32 %v62, %v72
    %v89 = vmul.f32 %v63, %v72
    %90 = vadd.xlane.f32.xlu0 %v74
    %v91 = vpop.xlane.xlu0 %90
    %92 = vadd.xlane.f32.xlu0 %v75
    %v93 = vpop.xlane.xlu0 %92
    %94 = vadd.xlane.f32.xlu0 %v76
    %v95 = vpop.xlane.xlu0 %94
    %96 = vadd.xlane.f32.xlu0 %v77
    %v97 = vpop.xlane.xlu0 %96
    %98 = vadd.xlane.f32.xlu0 %v78
    %v99 = vpop.xlane.xlu0 %98
    %100 = vadd.xlane.f32.xlu0 %v79
    %v101 = vpop.xlane.xlu0 %100
    %102 = vadd.xlane.f32.xlu0 %v80
    %v103 = vpop.xlane.xlu0 %102
    %104 = vadd.xlane.f32.xlu0 %v81
    %v105 = vpop.xlane.xlu0 %104
    %106 = vadd.xlane.f32.xlu0 %v82
    %v107 = vpop.xlane.xlu0 %106
    %108 = vadd.xlane.f32.xlu0 %v83
    %v109 = vpop.xlane.xlu0 %108
    %110 = vadd.xlane.f32.xlu0 %v84
    %v111 = vpop.xlane.xlu0 %110
    %112 = vadd.xlane.f32.xlu0 %v85
    %v113 = vpop.xlane.xlu0 %112
    %114 = vadd.xlane.f32.xlu0 %v86
    %v115 = vpop.xlane.xlu0 %114
    %116 = vadd.xlane.f32.xlu0 %v87
    %v117 = vpop.xlane.xlu0 %116
    %118 = vadd.xlane.f32.xlu0 %v88
    %v119 = vpop.xlane.xlu0 %118
    %120 = vadd.xlane.f32.xlu0 %v89
    %v121 = vpop.xlane.xlu0 %120
    %v122 = vmul.f32 %v48, %v48
    %v123 = vmul.f32 %v49, %v49
    %v124 = vmul.f32 %v50, %v50
    %v125 = vmul.f32 %v51, %v51
    %v126 = vmul.f32 %v52, %v52
    %v127 = vmul.f32 %v53, %v53
    %v128 = vmul.f32 %v54, %v54
    %v129 = vmul.f32 %v55, %v55
    %v130 = vmul.f32 %v56, %v56
    %v131 = vmul.f32 %v57, %v57
    %v132 = vmul.f32 %v58, %v58
    %v133 = vmul.f32 %v59, %v59
    %v134 = vmul.f32 %v60, %v60
    %v135 = vmul.f32 %v61, %v61
    %v136 = vmul.f32 %v62, %v62
    %v137 = vmul.f32 %v63, %v63
    %v139 = vlaneseq
    %v140 = vshrl.u32 %v139, 7
    %v141 = vsub.s32 0, %v140
    %v142 = vrot.slane %v65, %v141
    %v144 = vmul.f32 %v122, %v142
    %v145 = vmul.f32 %v123, %v142
    %v146 = vmul.f32 %v124, %v142
    %v147 = vmul.f32 %v125, %v142
    %v148 = vmul.f32 %v126, %v142
    %v149 = vmul.f32 %v127, %v142
    %v150 = vmul.f32 %v128, %v142
    %v151 = vmul.f32 %v129, %v142
    %v152 = vmul.f32 %v130, %v142
    %v153 = vmul.f32 %v131, %v142
    %v154 = vmul.f32 %v132, %v142
    %v155 = vmul.f32 %v133, %v142
    %v156 = vmul.f32 %v134, %v142
    %v157 = vmul.f32 %v135, %v142
    %v158 = vmul.f32 %v136, %v142
    %v159 = vmul.f32 %v137, %v142
    %160 = vadd.xlane.f32.xlu0 %v144
    %v161 = vpop.xlane.xlu0 %160
    %162 = vadd.xlane.f32.xlu0 %v145
    %v163 = vpop.xlane.xlu0 %162
    %164 = vadd.xlane.f32.xlu0 %v146
    %v165 = vpop.xlane.xlu0 %164
    %166 = vadd.xlane.f32.xlu0 %v147
    %v167 = vpop.xlane.xlu0 %166
    %168 = vadd.xlane.f32.xlu0 %v148
    %v169 = vpop.xlane.xlu0 %168
    %170 = vadd.xlane.f32.xlu0 %v149
    %v171 = vpop.xlane.xlu0 %170
    %172 = vadd.xlane.f32.xlu0 %v150
    %v173 = vpop.xlane.xlu0 %172
    %174 = vadd.xlane.f32.xlu0 %v151
    %v175 = vpop.xlane.xlu0 %174
    %176 = vadd.xlane.f32.xlu0 %v152
    %v177 = vpop.xlane.xlu0 %176
    %178 = vadd.xlane.f32.xlu0 %v153
    %v179 = vpop.xlane.xlu0 %178
    %180 = vadd.xlane.f32.xlu0 %v154
    %v181 = vpop.xlane.xlu0 %180
    %182 = vadd.xlane.f32.xlu0 %v155
    %v183 = vpop.xlane.xlu0 %182
    %184 = vadd.xlane.f32.xlu0 %v156
    %v185 = vpop.xlane.xlu0 %184
    %186 = vadd.xlane.f32.xlu0 %v157
    %v187 = vpop.xlane.xlu0 %186
    %188 = vadd.xlane.f32.xlu0 %v158
    %v189 = vpop.xlane.xlu0 %188
    %190 = vadd.xlane.f32.xlu0 %v159
    %v191 = vpop.xlane.xlu0 %190
    %v192 = vstv %s66
    %v193 = vadd.f32 %v91, %v192
    %v194 = vadd.f32 %v93, %v192
    %v195 = vadd.f32 %v95, %v192
    %v196 = vadd.f32 %v97, %v192
    %v197 = vadd.f32 %v99, %v192
    %v198 = vadd.f32 %v101, %v192
    %v199 = vadd.f32 %v103, %v192
    %v200 = vadd.f32 %v105, %v192
    %v201 = vadd.f32 %v107, %v192
    %v202 = vadd.f32 %v109, %v192
    %v203 = vadd.f32 %v111, %v192
    %v204 = vadd.f32 %v113, %v192
    %v205 = vadd.f32 %v115, %v192
    %v206 = vadd.f32 %v117, %v192
    %v207 = vadd.f32 %v119, %v192
    %v208 = vadd.f32 %v121, %v192
    %v209 = vmul.f32 %v91, %v91
    %v210 = vmul.f32 %v93, %v93
    %v211 = vmul.f32 %v95, %v95
    %v212 = vmul.f32 %v97, %v97
    %v213 = vmul.f32 %v99, %v99
    %v214 = vmul.f32 %v101, %v101
    %v215 = vmul.f32 %v103, %v103
    %v216 = vmul.f32 %v105, %v105
    %v217 = vmul.f32 %v107, %v107
    %v218 = vmul.f32 %v109, %v109
    %v219 = vmul.f32 %v111, %v111
    %v220 = vmul.f32 %v113, %v113
    %v221 = vmul.f32 %v115, %v115
    %v222 = vmul.f32 %v117, %v117
    %v223 = vmul.f32 %v119, %v119
    %v224 = vmul.f32 %v121, %v121
    %s225 = smul.f32 %s66, 2.0
    %v226 = vstv %s225
    %v227 = vmul.f32 %v226, %v91
    %v228 = vmul.f32 %v226, %v93
    %v229 = vmul.f32 %v226, %v95
    %v230 = vmul.f32 %v226, %v97
    %v231 = vmul.f32 %v226, %v99
    %v232 = vmul.f32 %v226, %v101
    %v233 = vmul.f32 %v226, %v103
    %v234 = vmul.f32 %v226, %v105
    %v235 = vmul.f32 %v226, %v107
    %v236 = vmul.f32 %v226, %v109
    %v237 = vmul.f32 %v226, %v111
    %v238 = vmul.f32 %v226, %v113
    %v239 = vmul.f32 %v226, %v115
    %v240 = vmul.f32 %v226, %v117
    %v241 = vmul.f32 %v226, %v119
    %v242 = vmul.f32 %v226, %v121
    %v243 = vadd.f32 %v209, %v227
    %v244 = vadd.f32 %v210, %v228
    %v245 = vadd.f32 %v211, %v229
    %v246 = vadd.f32 %v212, %v230
    %v247 = vadd.f32 %v213, %v231
    %v248 = vadd.f32 %v214, %v232
    %v249 = vadd.f32 %v215, %v233
    %v250 = vadd.f32 %v216, %v234
    %v251 = vadd.f32 %v217, %v235
    %v252 = vadd.f32 %v218, %v236
    %v253 = vadd.f32 %v219, %v237
    %v254 = vadd.f32 %v220, %v238
    %v255 = vadd.f32 %v221, %v239
    %v256 = vadd.f32 %v222, %v240
    %v257 = vadd.f32 %v223, %v241
    %v258 = vadd.f32 %v224, %v242
    %v259 = vadd.f32 %v243, %v161
    %v260 = vadd.f32 %v244, %v163
    %v261 = vadd.f32 %v245, %v165
    %v262 = vadd.f32 %v246, %v167
    %v263 = vadd.f32 %v247, %v169
    %v264 = vadd.f32 %v248, %v171
    %v265 = vadd.f32 %v249, %v173
    %v266 = vadd.f32 %v250, %v175
    %v267 = vadd.f32 %v251, %v177
    %v268 = vadd.f32 %v252, %v179
    %v269 = vadd.f32 %v253, %v181
    %v270 = vadd.f32 %v254, %v183
    %v271 = vadd.f32 %v255, %v185
    %v272 = vadd.f32 %v256, %v187
    %v273 = vadd.f32 %v257, %v189
    %v274 = vadd.f32 %v258, %v191
    %v275 = vstv %s67
    %v276 = vadd.f32 %v259, %v275
    %v277 = vadd.f32 %v260, %v275
    %v278 = vadd.f32 %v261, %v275
    %v279 = vadd.f32 %v262, %v275
    %v280 = vadd.f32 %v263, %v275
    %v281 = vadd.f32 %v264, %v275
    %v282 = vadd.f32 %v265, %v275
    %v283 = vadd.f32 %v266, %v275
    %v284 = vadd.f32 %v267, %v275
    %v285 = vadd.f32 %v268, %v275
    %v286 = vadd.f32 %v269, %v275
    %v287 = vadd.f32 %v270, %v275
    %v288 = vadd.f32 %v271, %v275
    %v289 = vadd.f32 %v272, %v275
    %v290 = vadd.f32 %v273, %v275
    %v291 = vadd.f32 %v274, %v275
    %v308 = vlaneseq
    %v309 = vand.u32 %v308, 127
    %v310 = vlaneseq
    %v311 = vshrl.u32 %v310, 7
    %v312 = vsub.s32 %v309, %v311
    %v313 = vrot.slane %v193, %v312
    %v314 = vadd.s32 %v309, 4294967288
    %v315 = vlaneseq
    %v316 = vshrl.u32 %v315, 7
    %v317 = vsub.s32 %v314, %v316
    %v318 = vrot.slane %v194, %v317
    %vm319 = vcmask 130112
    %v320 = vsel %vm319, %v318, %v313
    %v321 = vadd.s32 %v309, 4294967280
    %v322 = vlaneseq
    %v323 = vshrl.u32 %v322, 7
    %v324 = vsub.s32 %v321, %v323
    %v325 = vrot.slane %v195, %v324
    %vm326 = vcmask 195712
    %v327 = vsel %vm326, %v325, %v320
    %v328 = vadd.s32 %v309, 4294967272
    %v329 = vlaneseq
    %v330 = vshrl.u32 %v329, 7
    %v331 = vsub.s32 %v328, %v330
    %v332 = vrot.slane %v196, %v331
    %vm333 = vcmask 261312
    %v334 = vsel %vm333, %v332, %v327
    %v335 = vadd.s32 %v309, 4294967264
    %v336 = vlaneseq
    %v337 = vshrl.u32 %v336, 7
    %v338 = vsub.s32 %v335, %v337
    %v339 = vrot.slane %v197, %v338
    %vm340 = vcmask 326912
    %v341 = vsel %vm340, %v339, %v334
    %v342 = vadd.s32 %v309, 4294967256
    %v343 = vlaneseq
    %v344 = vshrl.u32 %v343, 7
    %v345 = vsub.s32 %v342, %v344
    %v346 = vrot.slane %v198, %v345
    %vm347 = vcmask 392512
    %v348 = vsel %vm347, %v346, %v341
    %v349 = vadd.s32 %v309, 4294967248
    %v350 = vlaneseq
    %v351 = vshrl.u32 %v350, 7
    %v352 = vsub.s32 %v349, %v351
    %v353 = vrot.slane %v199, %v352
    %vm354 = vcmask 458112
    %v355 = vsel %vm354, %v353, %v348
    %v356 = vadd.s32 %v309, 4294967240
    %v357 = vlaneseq
    %v358 = vshrl.u32 %v357, 7
    %v359 = vsub.s32 %v356, %v358
    %v360 = vrot.slane %v200, %v359
    %vm361 = vcmask 523712
    %v362 = vsel %vm361, %v360, %v355
    %v363 = vadd.s32 %v309, 4294967232
    %v364 = vlaneseq
    %v365 = vshrl.u32 %v364, 7
    %v366 = vsub.s32 %v363, %v365
    %v367 = vrot.slane %v201, %v366
    %vm368 = vcmask 589312
    %v369 = vsel %vm368, %v367, %v362
    %v370 = vadd.s32 %v309, 4294967224
    %v371 = vlaneseq
    %v372 = vshrl.u32 %v371, 7
    %v373 = vsub.s32 %v370, %v372
    %v374 = vrot.slane %v202, %v373
    %vm375 = vcmask 654912
    %v376 = vsel %vm375, %v374, %v369
    %v377 = vadd.s32 %v309, 4294967216
    %v378 = vlaneseq
    %v379 = vshrl.u32 %v378, 7
    %v380 = vsub.s32 %v377, %v379
    %v381 = vrot.slane %v203, %v380
    %vm382 = vcmask 720512
    %v383 = vsel %vm382, %v381, %v376
    %v384 = vadd.s32 %v309, 4294967208
    %v385 = vlaneseq
    %v386 = vshrl.u32 %v385, 7
    %v387 = vsub.s32 %v384, %v386
    %v388 = vrot.slane %v204, %v387
    %vm389 = vcmask 786112
    %v390 = vsel %vm389, %v388, %v383
    %v391 = vadd.s32 %v309, 4294967200
    %v392 = vlaneseq
    %v393 = vshrl.u32 %v392, 7
    %v394 = vsub.s32 %v391, %v393
    %v395 = vrot.slane %v205, %v394
    %vm396 = vcmask 851712
    %v397 = vsel %vm396, %v395, %v390
    %v398 = vadd.s32 %v309, 4294967192
    %v399 = vlaneseq
    %v400 = vshrl.u32 %v399, 7
    %v401 = vsub.s32 %v398, %v400
    %v402 = vrot.slane %v206, %v401
    %vm403 = vcmask 917312
    %v404 = vsel %vm403, %v402, %v397
    %v405 = vadd.s32 %v309, 4294967184
    %v406 = vlaneseq
    %v407 = vshrl.u32 %v406, 7
    %v408 = vsub.s32 %v405, %v407
    %v409 = vrot.slane %v207, %v408
    %vm410 = vcmask 982912
    %v411 = vsel %vm410, %v409, %v404
    %v412 = vadd.s32 %v309, 4294967176
    %v413 = vlaneseq
    %v414 = vshrl.u32 %v413, 7
    %v415 = vsub.s32 %v412, %v414
    %v416 = vrot.slane %v208, %v415
    %vm417 = vcmask 1048512
    %v418 = vsel %vm417, %v416, %v411
    %420 = vst [vmem:[#allocation7] sm:$0x1] %v418
    %v437 = vlaneseq
    %v438 = vshrl.u32 %v437, 7
    %v439 = vsub.s32 %v309, %v438
    %v440 = vrot.slane %v276, %v439
    %v441 = vlaneseq
    %v442 = vshrl.u32 %v441, 7
    %v443 = vsub.s32 %v314, %v442
    %v444 = vrot.slane %v277, %v443
    %v445 = vsel %vm319, %v444, %v440
    %v446 = vlaneseq
    %v447 = vshrl.u32 %v446, 7
    %v448 = vsub.s32 %v321, %v447
    %v449 = vrot.slane %v278, %v448
    %v450 = vsel %vm326, %v449, %v445
    %v451 = vlaneseq
    %v452 = vshrl.u32 %v451, 7
    %v453 = vsub.s32 %v328, %v452
    %v454 = vrot.slane %v279, %v453
    %v455 = vsel %vm333, %v454, %v450
    %v456 = vlaneseq
    %v457 = vshrl.u32 %v456, 7
    %v458 = vsub.s32 %v335, %v457
    %v459 = vrot.slane %v280, %v458
    %v460 = vsel %vm340, %v459, %v455
    %v461 = vlaneseq
    %v462 = vshrl.u32 %v461, 7
    %v463 = vsub.s32 %v342, %v462
    %v464 = vrot.slane %v281, %v463
    %v465 = vsel %vm347, %v464, %v460
    %v466 = vlaneseq
    %v467 = vshrl.u32 %v466, 7
    %v468 = vsub.s32 %v349, %v467
    %v469 = vrot.slane %v282, %v468
    %v470 = vsel %vm354, %v469, %v465
    %v471 = vlaneseq
    %v472 = vshrl.u32 %v471, 7
    %v473 = vsub.s32 %v356, %v472
    %v474 = vrot.slane %v283, %v473
    %v475 = vsel %vm361, %v474, %v470
    %v476 = vlaneseq
    %v477 = vshrl.u32 %v476, 7
    %v478 = vsub.s32 %v363, %v477
    %v479 = vrot.slane %v284, %v478
    %v480 = vsel %vm368, %v479, %v475
    %v481 = vlaneseq
    %v482 = vshrl.u32 %v481, 7
    %v483 = vsub.s32 %v370, %v482
    %v484 = vrot.slane %v285, %v483
    %v485 = vsel %vm375, %v484, %v480
    %v486 = vlaneseq
    %v487 = vshrl.u32 %v486, 7
    %v488 = vsub.s32 %v377, %v487
    %v489 = vrot.slane %v286, %v488
    %v490 = vsel %vm382, %v489, %v485
    %v491 = vlaneseq
    %v492 = vshrl.u32 %v491, 7
    %v493 = vsub.s32 %v384, %v492
    %v494 = vrot.slane %v287, %v493
    %v495 = vsel %vm389, %v494, %v490
    %v496 = vlaneseq
    %v497 = vshrl.u32 %v496, 7
    %v498 = vsub.s32 %v391, %v497
    %v499 = vrot.slane %v288, %v498
    %v500 = vsel %vm396, %v499, %v495
    %v501 = vlaneseq
    %v502 = vshrl.u32 %v501, 7
    %v503 = vsub.s32 %v398, %v502
    %v504 = vrot.slane %v289, %v503
    %v505 = vsel %vm403, %v504, %v500
    %v506 = vlaneseq
    %v507 = vshrl.u32 %v506, 7
    %v508 = vsub.s32 %v405, %v507
    %v509 = vrot.slane %v290, %v508
    %v510 = vsel %vm410, %v509, %v505
    %v511 = vlaneseq
    %v512 = vshrl.u32 %v511, 7
    %v513 = vsub.s32 %v412, %v512
    %v514 = vrot.slane %v291, %v513
    %v515 = vsel %vm417, %v514, %v510
    %517 = vst [vmem:[#allocation8] sm:$0x1] %v515
    // Predicated region
    $region26: #{tpu_custom_call.1} parent=1 // pred_check
      _
    $region27: #{tpu_custom_call.1} parent=1 // pred_check_branch
      %519 = sbr.rel (0) target = $region29
    $region28: #{tpu_custom_call.1} parent=1 // pred_region
      %s521 = ssub.s32 16, 16
      %522 = vsyncadd [#allocation4], %s521
      %s524 = sshll.u32 [#allocation7], 4
      %s525 = int_to_ptr.vmem [resolvable:$true] %s524
      %527 = dma.vmem_to_hbm [thread:$0]  %s525, 16, %s4, [#allocation4]
    $region29: #{tpu_custom_call.1} parent=1 // pred_fallthru
      _
    // Predicated region
    $region30: #{tpu_custom_call.1} parent=1 // pred_check
      _
    $region31: #{tpu_custom_call.1} parent=1 // pred_check_branch
      %529 = sbr.rel (0) target = $region33
    $region32: #{tpu_custom_call.1} parent=1 // pred_region
      %s531 = ssub.s32 16, 16
      %532 = vsyncadd [#allocation9], %s531
      %s534 = sshll.u32 [#allocation8], 4
      %s535 = int_to_ptr.vmem [resolvable:$true] %s534
      %537 = dma.vmem_to_hbm [thread:$0]  %s535, 16, %s5, [#allocation9]
    $region33: #{tpu_custom_call.1} parent=1 // pred_fallthru
      _
    // Predicated region
    $region34: #{tpu_custom_call.1} parent=1 // pred_check
      _
    $region35: #{tpu_custom_call.1} parent=1 // pred_check_branch
      %539 = sbr.rel (0) target = $region37
    $region36: #{tpu_custom_call.1} parent=1 // pred_region
      %540 = dma.done [#allocation4], 16
    $region37: #{tpu_custom_call.1} parent=1 // pred_fallthru
      _
    // Predicated region
    $region38: #{tpu_custom_call.1} parent=1 // pred_check
      _
    $region39: #{tpu_custom_call.1} parent=1 // pred_check_branch
      %542 = sbr.rel (0) target = $region41
    $region40: #{tpu_custom_call.1} parent=1 // pred_region
      %543 = dma.done [#allocation9], 16
    $region41: #{tpu_custom_call.1} parent=1 // pred_fallthru
      _
    %544 = vsyncpa [#allocation3], 1
    %545 = vsyncpa [#allocation4], 1
    %546 = vsyncpa [#allocation9], 1
    %547 = vsyncpa [#allocation5], 1

</llo_original>
